<compile_context>
chip_gen: v7x
topology: tpu7x:2x2x1
jax: 0.10.0
libtpu: 0.0.40
codegen_flags: <defaults>
</compile_context>

<pallas_src>
import functools

import jax
import jax.numpy as jnp
import numpy as np
from jax.experimental import pallas as pl
from jax.experimental.pallas import tpu as pltpu


# --------------------------- host-side constants -----------------------------


def _adaptive_pool_matrix(H, W, k):
    """(H*W, k*k) matrix P with pooled[c, i*k+j] = sum_hw x[c, hw] * P[hw, i*k+j],
    reproducing nn.AdaptiveAvgPool2d(k) exactly (floor/ceil windows)."""
    def axis(L):
        m = np.zeros((L, k), np.float32)
        for i in range(k):
            lo = (i * L) // k
            hi = -((-(i + 1) * L) // k)
            m[lo:hi, i] = 1.0 / (hi - lo)
        return m

    ph, pw = axis(H), axis(W)
    return jnp.asarray(np.einsum("hi,wj->hwij", ph, pw).reshape(H * W, k * k))


def _tap_masks(H, W, k):
    """(k*k, H*W) 0/1 masks: mask[t, h*W+w] == 1 iff the source pixel of tap
    t = di*k + dj lies inside the image (zero padding of the depthwise conv).
    These masks also zero every lane that a circular roll would wrap."""
    p = (k - 1) // 2
    h = np.arange(H)[:, None]
    w = np.arange(W)[None, :]
    ms = []
    for di in range(k):
        for dj in range(k):
            a, b = di - p, dj - p
            ms.append(((h + a >= 0) & (h + a < H) &
                       (w + b >= 0) & (w + b < W)).reshape(-1))
    return jnp.asarray(np.stack(ms, 0).astype(np.float32))


def _pick_batch_block(N, target):
    """Largest divisor of N <= target, preferring a grid of length >= 2 so the
    'parallel' batch axis can shard across v7x's two TensorCores."""
    divisors = [b for b in range(1, N + 1) if N % b == 0]
    cands = [b for b in divisors if b <= target and N // b >= 2]
    if cands:
        return max(cands)
    cands = [b for b in divisors if b <= target]
    return max(cands) if cands else 1


# ------------------------------ fused kernel ---------------------------------


def _dcm_fused_kernel(x_ref, pool_ref, mask_ref, w1_ref, b1_ref, w2_ref,
                      b2_ref, dwb_ref, wf_ref, bf_ref, o_ref, *, k, W, HW):
    p = (k - 1) // 2

    # Upcast the bf16 activation block once; all in-kernel math stays f32.
    x = x_ref[...].astype(jnp.float32)                           # (B*C, HW)

    # conv1 (1x1) across the whole per-step batch via a block-diagonal weight:
    # (B*C4, B*C) @ (B*C, HW) -> (B*C4, HW), lane-dense.
    f = jnp.dot(w1_ref[...], x, preferred_element_type=jnp.float32) + b1_ref[...]

    # AdaptiveAvgPool2d(k) folded into a (HW, k*k) matrix, then conv2 (1x1):
    # per-(sample, channel) depthwise taps g of shape (B*C4, k*k).
    pooled = jnp.dot(x, pool_ref[...], preferred_element_type=jnp.float32)
    g = jnp.dot(w2_ref[...], pooled, preferred_element_type=jnp.float32) + b2_ref[...]

    masks = mask_ref[...]                                        # (k*k, HW)

    # Per-sample depthwise conv: each tap is an XLU lane-roll of f; the
    # boundary mask zeroes out-of-image (== wrapped) sources; the dw_conv bias
    # initialises the accumulator.
    acc = jnp.broadcast_to(dwb_ref[...], f.shape)                # (B*C4, HW)
    for di in range(k):
        for dj in range(k):
            t = di * k + dj
            off = (di - p) * W + (dj - p)
            if off == 0:
                acc = acc + f * g[:, t:t + 1]
            else:
                src = pltpu.roll(f, shift=(-off) % HW, axis=1)
                acc = acc + src * (masks[t:t + 1, :] * g[:, t:t + 1])

    # fuse (1x1) across the batch: (B*C, B*C4) @ (B*C4, HW) -> (B*C, HW).
    y = jnp.dot(wf_ref[...], acc, preferred_element_type=jnp.float32) + bf_ref[...]
    o_ref[...] = y.astype(o_ref.dtype)


def dcm_forward(x, params, k, *, io_dtype=jnp.bfloat16):
    """DCMLayer.forward, fully fused into one batch-blocked Pallas kernel."""
    N, C, H, W = x.shape
    assert k % 2 == 1, "depthwise kernel size must be odd for 'same' padding"
    C4 = C // 4
    HW = H * W
    KK = k * k

    # Pick a per-step sample block B: ~1 MB of f32-equivalent per block, grid>=2.
    target = int(np.clip((1 << 20) // max(C * HW * 4, 1), 1, 64))
    B = _pick_batch_block(N, target)
    G = N // B
    assert (B * C) % 8 == 0, "B*C must be a multiple of 8 for (8,128) tiling"
    # TODO(synk): shapes with H*W % 128 != 0 fall back to masked stores (perf only).

    # Lane-dense 2-D slabs: contiguous -> metadata-only reshapes on the host.
    x2d = x.reshape(N * C, HW).astype(io_dtype)

    pool_mat = _adaptive_pool_matrix(H, W, k)                    # (HW, k*k)
    masks = _tap_masks(H, W, k)                                  # (k*k, HW)

    # Block-diagonal (kron) weights + tiled biases so one matmul covers all B
    # samples of a step and the tap loop runs on full (B*C4, HW) tiles.
    eye_b = jnp.eye(B, dtype=jnp.float32)
    W1 = jnp.kron(eye_b, params["conv1_w"].astype(jnp.float32))  # (B*C4, B*C)
    W2 = jnp.kron(eye_b, params["conv2_w"].astype(jnp.float32))  # (B*C4, B*C)
    WF = jnp.kron(eye_b, params["fuse_w"].astype(jnp.float32))   # (B*C,  B*C4)
    b1 = jnp.tile(params["conv1_b"].astype(jnp.float32), B).reshape(B * C4, 1)
    b2 = jnp.tile(params["conv2_b"].astype(jnp.float32), B).reshape(B * C4, 1)
    dwb = jnp.tile(params["dw_b"].astype(jnp.float32), B).reshape(B * C4, 1)
    bf = jnp.tile(params["fuse_b"].astype(jnp.float32), B).reshape(B * C, 1)

    kern = functools.partial(_dcm_fused_kernel, k=k, W=W, HW=HW)

    io_itemsize = np.dtype(io_dtype).itemsize
    const_bytes = 4 * (HW * KK + KK * HW
                       + 2 * (B * C4) * (B * C) + (B * C) * (B * C4)
                       + 3 * (B * C4) + (B * C))
    vmem_limit = min(int(4 * (B * C * HW * io_itemsize)   # in+out, double-buffered
                         + 2 * const_bytes
                         + (8 << 20)),                    # temporaries / headroom
                     48 << 20)                            # stay under v7x's 64 MiB

    flops = int(N * (2 * C4 * C * HW        # conv1
                     + 2 * C * HW * KK      # adaptive pool as matmul
                     + 2 * C4 * C * KK      # conv2
                     + 3 * KK * C4 * HW     # depthwise taps
                     + 2 * C * C4 * HW))    # fuse
    bytes_accessed = int(2 * N * C * HW * io_itemsize + const_bytes)

    out2d = pl.pallas_call(
        kern,
        out_shape=jax.ShapeDtypeStruct((N * C, HW), io_dtype),
        grid=(G,),
        in_specs=[
            pl.BlockSpec((B * C, HW), lambda n: (n, 0)),         # x block
            pl.BlockSpec((HW, KK), lambda n: (0, 0)),            # pooling matrix
            pl.BlockSpec((KK, HW), lambda n: (0, 0)),            # boundary masks
            pl.BlockSpec((B * C4, B * C), lambda n: (0, 0)),     # conv1 (blockdiag)
            pl.BlockSpec((B * C4, 1), lambda n: (0, 0)),         # conv1 bias
            pl.BlockSpec((B * C4, B * C), lambda n: (0, 0)),     # conv2 (blockdiag)
            pl.BlockSpec((B * C4, 1), lambda n: (0, 0)),         # conv2 bias
            pl.BlockSpec((B * C4, 1), lambda n: (0, 0)),         # dw_conv bias
            pl.BlockSpec((B * C, B * C4), lambda n: (0, 0)),     # fuse (blockdiag)
            pl.BlockSpec((B * C, 1), lambda n: (0, 0)),          # fuse bias
        ],
        out_specs=pl.BlockSpec((B * C, HW), lambda n: (n, 0)),
        compiler_params=pltpu.CompilerParams(
            dimension_semantics=("parallel",),
            vmem_limit_bytes=vmem_limit),
        cost_estimate=pl.CostEstimate(
            flops=flops, transcendentals=0, bytes_accessed=bytes_accessed),
    )(x2d, pool_mat, masks, W1, b1, W2, b2, dwb, WF, bf)

    return out2d.reshape(N, C, H, W)


# ------------------------------ pure-JAX reference ----------------------------


def adaptive_avg_pool2d(x, k):
    """Exact PyTorch AdaptiveAvgPool2d(k) semantics (floor/ceil windows)."""
    N, C, H, W = x.shape
    rows = []
    for i in range(k):
        h0, h1 = (i * H) // k, -((-(i + 1) * H) // k)
        cols = []
        for j in range(k):
            w0, w1 = (j * W) // k, -((-(j + 1) * W) // k)
            cols.append(jnp.mean(x[:, :, h0:h1, w0:w1], axis=(2, 3)))
        rows.append(jnp.stack(cols, axis=-1))
    return jnp.stack(rows, axis=-2)  # (N, C, k, k)


def dcm_reference(x, params, k):
    """Pure-JAX reference mirroring the PyTorch module."""
    w1, b1 = params["conv1_w"], params["conv1_b"]
    w2, b2 = params["conv2_w"], params["conv2_b"]
    wf, bf = params["fuse_w"], params["fuse_b"]
    dw_b = params["dw_b"]
    f = jnp.einsum("nchw,oc->nohw", x, w1) + b1[None, :, None, None]
    pooled = adaptive_avg_pool2d(x, k)
    g = jnp.einsum("nchw,oc->nohw", pooled, w2) + b2[None, :, None, None]
    p = (k - 1) // 2
    C4 = f.shape[1]
    outs = []
    for i in range(x.shape[0]):
        o = jax.lax.conv_general_dilated(
            f[i:i + 1],
            g[i][:, None, :, :],
            window_strides=(1, 1),
            padding=[(p, p), (p, p)],
            dimension_numbers=("NCHW", "OIHW", "NCHW"),
            feature_group_count=C4,
        )
        outs.append(o + dw_b[None, :, None, None])
    y = jnp.concatenate(outs, axis=0)
    return jnp.einsum("nchw,oc->nohw", y, wf) + bf[None, :, None, None]


# ----------------------------------- main -------------------------------------

if __name__ == "__main__":
    # Small shapes consistent with DCMLayer(k=3, channel=16)
    N, C, H, W = 2, 16, 16, 16
    k = 3
    C4 = C // 4

    key = jax.random.PRNGKey(0)
    keys = jax.random.split(key, 8)
    params = {
        "conv1_w": 0.1 * jax.random.normal(keys[0], (C4, C), jnp.float32),
        "conv1_b": 0.1 * jax.random.normal(keys[1], (C4,), jnp.float32),
        "conv2_w": 0.1 * jax.random.normal(keys[2], (C4, C), jnp.float32),
        "conv2_b": 0.1 * jax.random.normal(keys[3], (C4,), jnp.float32),
        "fuse_w": 0.1 * jax.random.normal(keys[4], (C, C4), jnp.float32),
        "fuse_b": 0.1 * jax.random.normal(keys[5], (C,), jnp.float32),
        # dw_conv bias persists across the per-sample weight swaps in PyTorch
        "dw_b": 0.1 * jax.random.normal(keys[6], (C4,), jnp.float32),
    }
    x = jax.random.normal(keys[7], (N, C, H, W), jnp.float32)

    out = jax.block_until_ready(dcm_forward(x, params, k))
    assert out.shape == (N, C, H, W)

    # Reference sees the same bf16-quantised input that the kernel reads from
    # HBM; tolerance covers the bf16 output cast + MXU reduction-order effects.
    x_q = x.astype(jnp.bfloat16).astype(jnp.float32)
    ref = jax.block_until_ready(dcm_reference(x_q, params, k))
    out_f32 = out.astype(jnp.float32)
    err = float(jnp.max(jnp.abs(out_f32 - ref)))
    assert jnp.allclose(out_f32, ref, rtol=2e-2, atol=2e-2), err
    print("KERNEL_OK")
</pallas_src>

<mosaic_0001>
module attributes {stable_mosaic.version = 11 : i64} {
  func.func @_dcm_fused_kernel(%arg0: i32, %arg1: memref<16x256xbf16, #tpu.memory_space<vmem>>, %arg2: memref<256x9xf32, #tpu.memory_space<vmem>>, %arg3: memref<9x256xf32, #tpu.memory_space<vmem>>, %arg4: memref<4x16xf32, #tpu.memory_space<vmem>>, %arg5: memref<4x1xf32, #tpu.memory_space<vmem>>, %arg6: memref<4x16xf32, #tpu.memory_space<vmem>>, %arg7: memref<4x1xf32, #tpu.memory_space<vmem>>, %arg8: memref<4x1xf32, #tpu.memory_space<vmem>>, %arg9: memref<16x4xf32, #tpu.memory_space<vmem>>, %arg10: memref<16x1xf32, #tpu.memory_space<vmem>>, %arg11: memref<16x256xbf16, #tpu.memory_space<vmem>>) attributes {dimension_semantics = [#tpu.dimension_semantics<parallel>], iteration_bounds = array<i64: 2>, scalar_prefetch = 0 : i64, scratch_operands = 0 : i64, tpu.core_type = #tpu.core_type<tc>, window_params = [{transform_indices = @transform_0, window_bounds = array<i64: 16, 256>}, {pipeline_mode = #tpu.pipeline_mode<synchronous>, transform_indices = @transform_1, window_bounds = array<i64: 256, 9>}, {pipeline_mode = #tpu.pipeline_mode<synchronous>, transform_indices = @transform_2, window_bounds = array<i64: 9, 256>}, {pipeline_mode = #tpu.pipeline_mode<synchronous>, transform_indices = @transform_3, window_bounds = array<i64: 4, 16>}, {pipeline_mode = #tpu.pipeline_mode<synchronous>, transform_indices = @transform_4, window_bounds = array<i64: 4, 1>}, {pipeline_mode = #tpu.pipeline_mode<synchronous>, transform_indices = @transform_5, window_bounds = array<i64: 4, 16>}, {pipeline_mode = #tpu.pipeline_mode<synchronous>, transform_indices = @transform_6, window_bounds = array<i64: 4, 1>}, {pipeline_mode = #tpu.pipeline_mode<synchronous>, transform_indices = @transform_7, window_bounds = array<i64: 4, 1>}, {pipeline_mode = #tpu.pipeline_mode<synchronous>, transform_indices = @transform_8, window_bounds = array<i64: 16, 4>}, {pipeline_mode = #tpu.pipeline_mode<synchronous>, transform_indices = @transform_9, window_bounds = array<i64: 16, 1>}, {transform_indices = @transform_10, window_bounds = array<i64: 16, 256>}]} {
    %c0 = arith.constant 0 : index
    %c0_0 = arith.constant 0 : index
    %0 = vector.load %arg1[%c0, %c0_0] : memref<16x256xbf16, #tpu.memory_space<vmem>>, vector<16x256xbf16>
    %1 = arith.extf %0 : vector<16x256xbf16> to vector<16x256xf32>
    %c0_1 = arith.constant 0 : index
    %c0_2 = arith.constant 0 : index
    %2 = vector.load %arg4[%c0_1, %c0_2] : memref<4x16xf32, #tpu.memory_space<vmem>>, vector<4x16xf32>
    %cst = arith.constant dense<0.000000e+00> : vector<4x256xf32>
    %3 = tpu.matmul %2, %1, %cst {dimension_numbers = #tpu.dot_dimension_numbers<[1], [0], [0], [1], [0, 0, 1, 1], [], []>} : vector<4x16xf32>, vector<16x256xf32>, vector<4x256xf32> -> vector<4x256xf32>
    %c0_3 = arith.constant 0 : index
    %c0_4 = arith.constant 0 : index
    %4 = vector.load %arg5[%c0_3, %c0_4] : memref<4x1xf32, #tpu.memory_space<vmem>>, vector<4x1xf32>
    %5 = vector.broadcast %4 : vector<4x1xf32> to vector<4x256xf32>
    %6 = arith.addf %3, %5 : vector<4x256xf32>
    %c0_5 = arith.constant 0 : index
    %c0_6 = arith.constant 0 : index
    %7 = vector.load %arg2[%c0_5, %c0_6] : memref<256x9xf32, #tpu.memory_space<vmem>>, vector<256x9xf32>
    %cst_7 = arith.constant dense<0.000000e+00> : vector<16x9xf32>
    %8 = tpu.matmul %1, %7, %cst_7 {dimension_numbers = #tpu.dot_dimension_numbers<[1], [0], [0], [1], [0, 0, 1, 1], [], []>} : vector<16x256xf32>, vector<256x9xf32>, vector<16x9xf32> -> vector<16x9xf32>
    %c0_8 = arith.constant 0 : index
    %c0_9 = arith.constant 0 : index
    %9 = vector.load %arg6[%c0_8, %c0_9] : memref<4x16xf32, #tpu.memory_space<vmem>>, vector<4x16xf32>
    %cst_10 = arith.constant dense<0.000000e+00> : vector<4x9xf32>
    %10 = tpu.matmul %9, %8, %cst_10 {dimension_numbers = #tpu.dot_dimension_numbers<[1], [0], [0], [1], [0, 0, 1, 1], [], []>} : vector<4x16xf32>, vector<16x9xf32>, vector<4x9xf32> -> vector<4x9xf32>
    %c0_11 = arith.constant 0 : index
    %c0_12 = arith.constant 0 : index
    %11 = vector.load %arg7[%c0_11, %c0_12] : memref<4x1xf32, #tpu.memory_space<vmem>>, vector<4x1xf32>
    %12 = vector.broadcast %11 : vector<4x1xf32> to vector<4x9xf32>
    %13 = arith.addf %10, %12 : vector<4x9xf32>
    %c0_13 = arith.constant 0 : index
    %c0_14 = arith.constant 0 : index
    %14 = vector.load %arg3[%c0_13, %c0_14] : memref<9x256xf32, #tpu.memory_space<vmem>>, vector<9x256xf32>
    %c0_15 = arith.constant 0 : index
    %c0_16 = arith.constant 0 : index
    %15 = vector.load %arg8[%c0_15, %c0_16] : memref<4x1xf32, #tpu.memory_space<vmem>>, vector<4x1xf32>
    %16 = vector.shape_cast %15 : vector<4x1xf32> to vector<4x1xf32>
    %17 = vector.broadcast %16 : vector<4x1xf32> to vector<4x256xf32>
    %c17_i32 = arith.constant 17 : i32
    %18 = tpu.dynamic_rotate %6 by %c17_i32 dim 1 : vector<4x256xf32>, i32 -> vector<4x256xf32>
    %19 = vector.extract_strided_slice %14 {offsets = [0, 0], sizes = [1, 256], strides = [1, 1]} : vector<9x256xf32> to vector<1x256xf32>
    %20 = vector.extract_strided_slice %13 {offsets = [0, 0], sizes = [4, 1], strides = [1, 1]} : vector<4x9xf32> to vector<4x1xf32>
    %21 = vector.broadcast %19 : vector<1x256xf32> to vector<4x256xf32>
    %22 = vector.broadcast %20 : vector<4x1xf32> to vector<4x256xf32>
    %23 = arith.mulf %21, %22 : vector<4x256xf32>
    %24 = arith.mulf %18, %23 : vector<4x256xf32>
    %25 = arith.addf %17, %24 : vector<4x256xf32>
    %c16_i32 = arith.constant 16 : i32
    %26 = tpu.dynamic_rotate %6 by %c16_i32 dim 1 : vector<4x256xf32>, i32 -> vector<4x256xf32>
    %27 = vector.extract_strided_slice %14 {offsets = [1, 0], sizes = [1, 256], strides = [1, 1]} : vector<9x256xf32> to vector<1x256xf32>
    %28 = vector.extract_strided_slice %13 {offsets = [0, 1], sizes = [4, 1], strides = [1, 1]} : vector<4x9xf32> to vector<4x1xf32>
    %29 = vector.broadcast %27 : vector<1x256xf32> to vector<4x256xf32>
    %30 = vector.broadcast %28 : vector<4x1xf32> to vector<4x256xf32>
    %31 = arith.mulf %29, %30 : vector<4x256xf32>
    %32 = arith.mulf %26, %31 : vector<4x256xf32>
    %33 = arith.addf %25, %32 : vector<4x256xf32>
    %c15_i32 = arith.constant 15 : i32
    %34 = tpu.dynamic_rotate %6 by %c15_i32 dim 1 : vector<4x256xf32>, i32 -> vector<4x256xf32>
    %35 = vector.extract_strided_slice %14 {offsets = [2, 0], sizes = [1, 256], strides = [1, 1]} : vector<9x256xf32> to vector<1x256xf32>
    %36 = vector.extract_strided_slice %13 {offsets = [0, 2], sizes = [4, 1], strides = [1, 1]} : vector<4x9xf32> to vector<4x1xf32>
    %37 = vector.broadcast %35 : vector<1x256xf32> to vector<4x256xf32>
    %38 = vector.broadcast %36 : vector<4x1xf32> to vector<4x256xf32>
    %39 = arith.mulf %37, %38 : vector<4x256xf32>
    %40 = arith.mulf %34, %39 : vector<4x256xf32>
    %41 = arith.addf %33, %40 : vector<4x256xf32>
    %c1_i32 = arith.constant 1 : i32
    %42 = tpu.dynamic_rotate %6 by %c1_i32 dim 1 : vector<4x256xf32>, i32 -> vector<4x256xf32>
    %43 = vector.extract_strided_slice %14 {offsets = [3, 0], sizes = [1, 256], strides = [1, 1]} : vector<9x256xf32> to vector<1x256xf32>
    %44 = vector.extract_strided_slice %13 {offsets = [0, 3], sizes = [4, 1], strides = [1, 1]} : vector<4x9xf32> to vector<4x1xf32>
    %45 = vector.broadcast %43 : vector<1x256xf32> to vector<4x256xf32>
    %46 = vector.broadcast %44 : vector<4x1xf32> to vector<4x256xf32>
    %47 = arith.mulf %45, %46 : vector<4x256xf32>
    %48 = arith.mulf %42, %47 : vector<4x256xf32>
    %49 = arith.addf %41, %48 : vector<4x256xf32>
    %50 = vector.extract_strided_slice %13 {offsets = [0, 4], sizes = [4, 1], strides = [1, 1]} : vector<4x9xf32> to vector<4x1xf32>
    %51 = vector.broadcast %50 : vector<4x1xf32> to vector<4x256xf32>
    %52 = arith.mulf %6, %51 : vector<4x256xf32>
    %53 = arith.addf %49, %52 : vector<4x256xf32>
    %c255_i32 = arith.constant 255 : i32
    %54 = tpu.dynamic_rotate %6 by %c255_i32 dim 1 : vector<4x256xf32>, i32 -> vector<4x256xf32>
    %55 = vector.extract_strided_slice %14 {offsets = [5, 0], sizes = [1, 256], strides = [1, 1]} : vector<9x256xf32> to vector<1x256xf32>
    %56 = vector.extract_strided_slice %13 {offsets = [0, 5], sizes = [4, 1], strides = [1, 1]} : vector<4x9xf32> to vector<4x1xf32>
    %57 = vector.broadcast %55 : vector<1x256xf32> to vector<4x256xf32>
    %58 = vector.broadcast %56 : vector<4x1xf32> to vector<4x256xf32>
    %59 = arith.mulf %57, %58 : vector<4x256xf32>
    %60 = arith.mulf %54, %59 : vector<4x256xf32>
    %61 = arith.addf %53, %60 : vector<4x256xf32>
    %c241_i32 = arith.constant 241 : i32
    %62 = tpu.dynamic_rotate %6 by %c241_i32 dim 1 : vector<4x256xf32>, i32 -> vector<4x256xf32>
    %63 = vector.extract_strided_slice %14 {offsets = [6, 0], sizes = [1, 256], strides = [1, 1]} : vector<9x256xf32> to vector<1x256xf32>
    %64 = vector.extract_strided_slice %13 {offsets = [0, 6], sizes = [4, 1], strides = [1, 1]} : vector<4x9xf32> to vector<4x1xf32>
    %65 = vector.broadcast %63 : vector<1x256xf32> to vector<4x256xf32>
    %66 = vector.broadcast %64 : vector<4x1xf32> to vector<4x256xf32>
    %67 = arith.mulf %65, %66 : vector<4x256xf32>
    %68 = arith.mulf %62, %67 : vector<4x256xf32>
    %69 = arith.addf %61, %68 : vector<4x256xf32>
    %c240_i32 = arith.constant 240 : i32
    %70 = tpu.dynamic_rotate %6 by %c240_i32 dim 1 : vector<4x256xf32>, i32 -> vector<4x256xf32>
    %71 = vector.extract_strided_slice %14 {offsets = [7, 0], sizes = [1, 256], strides = [1, 1]} : vector<9x256xf32> to vector<1x256xf32>
    %72 = vector.extract_strided_slice %13 {offsets = [0, 7], sizes = [4, 1], strides = [1, 1]} : vector<4x9xf32> to vector<4x1xf32>
    %73 = vector.broadcast %71 : vector<1x256xf32> to vector<4x256xf32>
    %74 = vector.broadcast %72 : vector<4x1xf32> to vector<4x256xf32>
    %75 = arith.mulf %73, %74 : vector<4x256xf32>
    %76 = arith.mulf %70, %75 : vector<4x256xf32>
    %77 = arith.addf %69, %76 : vector<4x256xf32>
    %c239_i32 = arith.constant 239 : i32
    %78 = tpu.dynamic_rotate %6 by %c239_i32 dim 1 : vector<4x256xf32>, i32 -> vector<4x256xf32>
    %79 = vector.extract_strided_slice %14 {offsets = [8, 0], sizes = [1, 256], strides = [1, 1]} : vector<9x256xf32> to vector<1x256xf32>
    %80 = vector.extract_strided_slice %13 {offsets = [0, 8], sizes = [4, 1], strides = [1, 1]} : vector<4x9xf32> to vector<4x1xf32>
    %81 = vector.broadcast %79 : vector<1x256xf32> to vector<4x256xf32>
    %82 = vector.broadcast %80 : vector<4x1xf32> to vector<4x256xf32>
    %83 = arith.mulf %81, %82 : vector<4x256xf32>
    %84 = arith.mulf %78, %83 : vector<4x256xf32>
    %85 = arith.addf %77, %84 : vector<4x256xf32>
    %c0_17 = arith.constant 0 : index
    %c0_18 = arith.constant 0 : index
    %86 = vector.load %arg9[%c0_17, %c0_18] : memref<16x4xf32, #tpu.memory_space<vmem>>, vector<16x4xf32>
    %cst_19 = arith.constant dense<0.000000e+00> : vector<16x256xf32>
    %87 = tpu.matmul %86, %85, %cst_19 {dimension_numbers = #tpu.dot_dimension_numbers<[1], [0], [0], [1], [0, 0, 1, 1], [], []>} : vector<16x4xf32>, vector<4x256xf32>, vector<16x256xf32> -> vector<16x256xf32>
    %c0_20 = arith.constant 0 : index
    %c0_21 = arith.constant 0 : index
    %88 = vector.load %arg10[%c0_20, %c0_21] : memref<16x1xf32, #tpu.memory_space<vmem>>, vector<16x1xf32>
    %89 = vector.broadcast %88 : vector<16x1xf32> to vector<16x256xf32>
    %90 = arith.addf %87, %89 : vector<16x256xf32>
    %91 = arith.truncf %90 : vector<16x256xf32> to vector<16x256xbf16>
    %c0_22 = arith.constant 0 : index
    %c0_23 = arith.constant 0 : index
    %92 = vector.load %arg11[%c0_22, %c0_23] : memref<16x256xbf16, #tpu.memory_space<vmem>>, vector<16x256xbf16>
    tpu.vector_store %arg11[%c0_22, %c0_23], %91 {strides = array<i32>} : memref<16x256xbf16, #tpu.memory_space<vmem>>, vector<16x256xbf16>,
    return
  }
  func.func @transform_0(%arg0: i32) -> (i32, i32) {
    %c0_i32 = arith.constant 0 : i32
    %c0_i32_0 = arith.constant 0 : i32
    return %arg0, %c0_i32 : i32, i32
  }
  func.func @transform_1(%arg0: i32) -> (i32, i32) {
    %c0_i32 = arith.constant 0 : i32
    %c0_i32_0 = arith.constant 0 : i32
    %c0_i32_1 = arith.constant 0 : i32
    return %c0_i32, %c0_i32_0 : i32, i32
  }
  func.func @transform_2(%arg0: i32) -> (i32, i32) {
    %c0_i32 = arith.constant 0 : i32
    %c0_i32_0 = arith.constant 0 : i32
    %c0_i32_1 = arith.constant 0 : i32
    return %c0_i32, %c0_i32_0 : i32, i32
  }
  func.func @transform_3(%arg0: i32) -> (i32, i32) {
    %c0_i32 = arith.constant 0 : i32
    %c0_i32_0 = arith.constant 0 : i32
    %c0_i32_1 = arith.constant 0 : i32
    return %c0_i32, %c0_i32_0 : i32, i32
  }
  func.func @transform_4(%arg0: i32) -> (i32, i32) {
    %c0_i32 = arith.constant 0 : i32
    %c0_i32_0 = arith.constant 0 : i32
    %c0_i32_1 = arith.constant 0 : i32
    return %c0_i32, %c0_i32_0 : i32, i32
  }
  func.func @transform_5(%arg0: i32) -> (i32, i32) {
    %c0_i32 = arith.constant 0 : i32
    %c0_i32_0 = arith.constant 0 : i32
    %c0_i32_1 = arith.constant 0 : i32
    return %c0_i32, %c0_i32_0 : i32, i32
  }
  func.func @transform_6(%arg0: i32) -> (i32, i32) {
    %c0_i32 = arith.constant 0 : i32
    %c0_i32_0 = arith.constant 0 : i32
    %c0_i32_1 = arith.constant 0 : i32
    return %c0_i32, %c0_i32_0 : i32, i32
  }
  func.func @transform_7(%arg0: i32) -> (i32, i32) {
    %c0_i32 = arith.constant 0 : i32
    %c0_i32_0 = arith.constant 0 : i32
    %c0_i32_1 = arith.constant 0 : i32
    return %c0_i32, %c0_i32_0 : i32, i32
  }
  func.func @transform_8(%arg0: i32) -> (i32, i32) {
    %c0_i32 = arith.constant 0 : i32
    %c0_i32_0 = arith.constant 0 : i32
    %c0_i32_1 = arith.constant 0 : i32
    return %c0_i32, %c0_i32_0 : i32, i32
  }
  func.func @transform_9(%arg0: i32) -> (i32, i32) {
    %c0_i32 = arith.constant 0 : i32
    %c0_i32_0 = arith.constant 0 : i32
    %c0_i32_1 = arith.constant 0 : i32
    return %c0_i32, %c0_i32_0 : i32, i32
  }
  func.func @transform_10(%arg0: i32) -> (i32, i32) {
    %c0_i32 = arith.constant 0 : i32
    %c0_i32_0 = arith.constant 0 : i32
    return %arg0, %c0_i32 : i32, i32
  }
}

</mosaic_0001>

<llo_original>
// kernel: tpu_custom_call.1
$region0: #{tpu_custom_call.1}
  #allocation0 [shape = 'u32[]', space=smem, size = 0x4, offset = 0x4, fixed_abs, tag = 'smem constant byte address 0x4 - core index']
  #allocation1 [shape = 'u32[144,128]{1,0:T(1,128)}', space=vmem, size = 0x12000, scoped, tag = 'internal scratch']
  %s0 = inlined_call_operand.vmem [shape: bf16[32,256], index: 0, kind: input, shape index: {}]
  %s1 = inlined_call_operand.vmem [shape: f32[256,9], index: 1, kind: input, shape index: {}]
  %s2 = inlined_call_operand.vmem [shape: f32[9,256], index: 2, kind: input, shape index: {}]
  %s3 = inlined_call_operand.vmem [shape: f32[4,16], index: 3, kind: input, shape index: {}]
  %s4 = inlined_call_operand.vmem [shape: f32[4,1], index: 4, kind: input, shape index: {}]
  %s5 = inlined_call_operand.vmem [shape: f32[4,16], index: 5, kind: input, shape index: {}]
  %s6 = inlined_call_operand.vmem [shape: f32[4,1], index: 6, kind: input, shape index: {}]
  %s7 = inlined_call_operand.vmem [shape: f32[4,1], index: 7, kind: input, shape index: {}]
  %s8 = inlined_call_operand.vmem [shape: f32[16,4], index: 8, kind: input, shape index: {}]
  %s9 = inlined_call_operand.vmem [shape: f32[16,1], index: 9, kind: input, shape index: {}]
  %s10 = inlined_call_operand.hbm [shape: bf16[32,256], index: 10, kind: output, shape index: {}]
  %s11 = sld [smem:[#allocation0]]
  $region73: #{tpu_custom_call.1} parent=0
    _
  %s13 = ssub.s32 1, %s11
  %s14 = scalar_select 0, %s13, %s11
  $region1: #{tpu_custom_call.1} parent=0
    #allocation2 [shape = 'u8[16384]{0}', space=vmem, size = 0x4000, scoped, tag = 'output window, operand 0']
    #allocation3 [shape = 's32[2]{0}', space=sflag, size = 0x8, scoped, tag = 'scoped memory for tpu_custom_call.1']
    %15 = vsyncpa [#allocation3], 0
    %s16 = scalar_lea.sflag [#allocation3], 1
    %17 = vsyncpa %s16, 0
    loop: start=0, step=1, limit=4
    $region2: #{tpu_custom_call.1} parent=1 // loop_pre_header
      _
    $region3: #{tpu_custom_call.1} parent=1 // loop_header
      %s19 = sphi 0, %s23
      %p20 = scmp.ge.s32.totalorder %s19, 4
      %s29 = sphi 0, %s31
      %s32 = sphi 0, %s29
      %s33 = sphi 0, %s32
      %s49 = sphi 0, %s33
      %s53 = sphi 0, %s53
      %s55 = sphi 0, %s53
      %s56 = sphi 0, %s55
      %s70 = sphi 0, %s56
      %s74 = sphi 0, %s74
      %s76 = sphi 0, %s74
      %s77 = sphi 0, %s76
      %s91 = sphi 0, %s77
      %s95 = sphi 0, %s95
      %s97 = sphi 0, %s95
      %s98 = sphi 0, %s97
      %s112 = sphi 0, %s98
      %s116 = sphi 0, %s116
      %s118 = sphi 0, %s116
      %s119 = sphi 0, %s118
      %s133 = sphi 0, %s119
      %s137 = sphi 0, %s137
      %s139 = sphi 0, %s137
      %s140 = sphi 0, %s139
      %s154 = sphi 0, %s140
      %s158 = sphi 0, %s158
      %s160 = sphi 0, %s158
      %s161 = sphi 0, %s160
      %s175 = sphi 0, %s161
      %s179 = sphi 0, %s179
      %s181 = sphi 0, %s179
      %s182 = sphi 0, %s181
      %s196 = sphi 0, %s182
      %s200 = sphi 0, %s200
      %s202 = sphi 0, %s200
      %s203 = sphi 0, %s202
      %s217 = sphi 0, %s203
      %s221 = sphi 0, %s221
      %s223 = sphi 0, %s221
      %s224 = sphi 0, %s223
      %s238 = sphi 0, %s224
      %s244 = sphi 0, %s246
      %s247 = sphi 0, %s244
      %s248 = sphi 0, %s247
      %s264 = sphi 0, %s248
    $region4: #{tpu_custom_call.1} parent=1 // loop_header_branch
      %22 = sbr.rel (%p20) target = $region8
    $region5: #{tpu_custom_call.1} parent=1 // loop_body
      %s24 = ssub.s32 %s19, 1
      %s25 = ssub.s32 %s19, 2
      %s26 = sadd.s32 %s19, 1
      %s27 = ssub.s32 %s19, %s26
      %p28 = scmp.eq.s32.totalorder %s27, 0
      %s30 = sadd.s32 %s29, 1
      %s31 = scalar_select %p28, %s29, %s30
      %p34 = pneg %p28
      %p35 = scmp.eq.s32.totalorder %s19, 1
      %p36 = por %p34, %p35
      %p37 = scmp.ne.s32.totalorder %s29, %s32
      %p38 = scmp.eq.s32.totalorder %s19, 0
      %p39 = por %p37, %p38
      %p40 = scmp.ne.s32.totalorder %s29, %s32
      %p41 = scmp.eq.s32.totalorder %s24, 1
      %p42 = por %p40, %p41
      %p43 = scmp.ne.s32.totalorder %s32, %s33
      %p44 = scmp.eq.s32.totalorder %s24, 0
      %p45 = por %p43, %p44
      %p46 = scmp.ne.s32.totalorder %s32, %s33
      %p47 = scmp.eq.s32.totalorder %s25, 1
      %p48 = por %p46, %p47
      %p50 = scmp.ne.s32.totalorder %s33, %s49
      %p51 = scmp.eq.s32.totalorder %s25, 0
      %p52 = por %p50, %p51
      %s54 = sadd.s32 %s53, 1
      %p57 = scmp.eq.s32.totalorder %s19, 1
      %p58 = scmp.ne.s32.totalorder %s53, %s55
      %p59 = scmp.eq.s32.totalorder %s19, 0
      %p60 = por %p58, %p59
      %p61 = scmp.ne.s32.totalorder %s53, %s55
      %p62 = scmp.eq.s32.totalorder %s24, 1
      %p63 = por %p61, %p62
      %p64 = scmp.ne.s32.totalorder %s55, %s56
      %p65 = scmp.eq.s32.totalorder %s24, 0
      %p66 = por %p64, %p65
      %p67 = scmp.ne.s32.totalorder %s55, %s56
      %p68 = scmp.eq.s32.totalorder %s25, 1
      %p69 = por %p67, %p68
      %p71 = scmp.ne.s32.totalorder %s56, %s70
      %p72 = scmp.eq.s32.totalorder %s25, 0
      %p73 = por %p71, %p72
      %s75 = sadd.s32 %s74, 1
      %p78 = scmp.eq.s32.totalorder %s19, 1
      %p79 = scmp.ne.s32.totalorder %s74, %s76
      %p80 = scmp.eq.s32.totalorder %s19, 0
      %p81 = por %p79, %p80
      %p82 = scmp.ne.s32.totalorder %s74, %s76
      %p83 = scmp.eq.s32.totalorder %s24, 1
      %p84 = por %p82, %p83
      %p85 = scmp.ne.s32.totalorder %s76, %s77
      %p86 = scmp.eq.s32.totalorder %s24, 0
      %p87 = por %p85, %p86
      %p88 = scmp.ne.s32.totalorder %s76, %s77
      %p89 = scmp.eq.s32.totalorder %s25, 1
      %p90 = por %p88, %p89
      %p92 = scmp.ne.s32.totalorder %s77, %s91
      %p93 = scmp.eq.s32.totalorder %s25, 0
      %p94 = por %p92, %p93
      %s96 = sadd.s32 %s95, 1
      %p99 = scmp.eq.s32.totalorder %s19, 1
      %p100 = scmp.ne.s32.totalorder %s95, %s97
      %p101 = scmp.eq.s32.totalorder %s19, 0
      %p102 = por %p100, %p101
      %p103 = scmp.ne.s32.totalorder %s95, %s97
      %p104 = scmp.eq.s32.totalorder %s24, 1
      %p105 = por %p103, %p104
      %p106 = scmp.ne.s32.totalorder %s97, %s98
      %p107 = scmp.eq.s32.totalorder %s24, 0
      %p108 = por %p106, %p107
      %p109 = scmp.ne.s32.totalorder %s97, %s98
      %p110 = scmp.eq.s32.totalorder %s25, 1
      %p111 = por %p109, %p110
      %p113 = scmp.ne.s32.totalorder %s98, %s112
      %p114 = scmp.eq.s32.totalorder %s25, 0
      %p115 = por %p113, %p114
      %s117 = sadd.s32 %s116, 1
      %p120 = scmp.eq.s32.totalorder %s19, 1
      %p121 = scmp.ne.s32.totalorder %s116, %s118
      %p122 = scmp.eq.s32.totalorder %s19, 0
      %p123 = por %p121, %p122
      %p124 = scmp.ne.s32.totalorder %s116, %s118
      %p125 = scmp.eq.s32.totalorder %s24, 1
      %p126 = por %p124, %p125
      %p127 = scmp.ne.s32.totalorder %s118, %s119
      %p128 = scmp.eq.s32.totalorder %s24, 0
      %p129 = por %p127, %p128
      %p130 = scmp.ne.s32.totalorder %s118, %s119
      %p131 = scmp.eq.s32.totalorder %s25, 1
      %p132 = por %p130, %p131
      %p134 = scmp.ne.s32.totalorder %s119, %s133
      %p135 = scmp.eq.s32.totalorder %s25, 0
      %p136 = por %p134, %p135
      %s138 = sadd.s32 %s137, 1
      %p141 = scmp.eq.s32.totalorder %s19, 1
      %p142 = scmp.ne.s32.totalorder %s137, %s139
      %p143 = scmp.eq.s32.totalorder %s19, 0
      %p144 = por %p142, %p143
      %p145 = scmp.ne.s32.totalorder %s137, %s139
      %p146 = scmp.eq.s32.totalorder %s24, 1
      %p147 = por %p145, %p146
      %p148 = scmp.ne.s32.totalorder %s139, %s140
      %p149 = scmp.eq.s32.totalorder %s24, 0
      %p150 = por %p148, %p149
      %p151 = scmp.ne.s32.totalorder %s139, %s140
      %p152 = scmp.eq.s32.totalorder %s25, 1
      %p153 = por %p151, %p152
      %p155 = scmp.ne.s32.totalorder %s140, %s154
      %p156 = scmp.eq.s32.totalorder %s25, 0
      %p157 = por %p155, %p156
      %s159 = sadd.s32 %s158, 1
      %p162 = scmp.eq.s32.totalorder %s19, 1
      %p163 = scmp.ne.s32.totalorder %s158, %s160
      %p164 = scmp.eq.s32.totalorder %s19, 0
      %p165 = por %p163, %p164
      %p166 = scmp.ne.s32.totalorder %s158, %s160
      %p167 = scmp.eq.s32.totalorder %s24, 1
      %p168 = por %p166, %p167
      %p169 = scmp.ne.s32.totalorder %s160, %s161
      %p170 = scmp.eq.s32.totalorder %s24, 0
      %p171 = por %p169, %p170
      %p172 = scmp.ne.s32.totalorder %s160, %s161
      %p173 = scmp.eq.s32.totalorder %s25, 1
      %p174 = por %p172, %p173
      %p176 = scmp.ne.s32.totalorder %s161, %s175
      %p177 = scmp.eq.s32.totalorder %s25, 0
      %p178 = por %p176, %p177
      %s180 = sadd.s32 %s179, 1
      %p183 = scmp.eq.s32.totalorder %s19, 1
      %p184 = scmp.ne.s32.totalorder %s179, %s181
      %p185 = scmp.eq.s32.totalorder %s19, 0
      %p186 = por %p184, %p185
      %p187 = scmp.ne.s32.totalorder %s179, %s181
      %p188 = scmp.eq.s32.totalorder %s24, 1
      %p189 = por %p187, %p188
      %p190 = scmp.ne.s32.totalorder %s181, %s182
      %p191 = scmp.eq.s32.totalorder %s24, 0
      %p192 = por %p190, %p191
      %p193 = scmp.ne.s32.totalorder %s181, %s182
      %p194 = scmp.eq.s32.totalorder %s25, 1
      %p195 = por %p193, %p194
      %p197 = scmp.ne.s32.totalorder %s182, %s196
      %p198 = scmp.eq.s32.totalorder %s25, 0
      %p199 = por %p197, %p198
      %s201 = sadd.s32 %s200, 1
      %p204 = scmp.eq.s32.totalorder %s19, 1
      %p205 = scmp.ne.s32.totalorder %s200, %s202
      %p206 = scmp.eq.s32.totalorder %s19, 0
      %p207 = por %p205, %p206
      %p208 = scmp.ne.s32.totalorder %s200, %s202
      %p209 = scmp.eq.s32.totalorder %s24, 1
      %p210 = por %p208, %p209
      %p211 = scmp.ne.s32.totalorder %s202, %s203
      %p212 = scmp.eq.s32.totalorder %s24, 0
      %p213 = por %p211, %p212
      %p214 = scmp.ne.s32.totalorder %s202, %s203
      %p215 = scmp.eq.s32.totalorder %s25, 1
      %p216 = por %p214, %p215
      %p218 = scmp.ne.s32.totalorder %s203, %s217
      %p219 = scmp.eq.s32.totalorder %s25, 0
      %p220 = por %p218, %p219
      %s222 = sadd.s32 %s221, 1
      %p225 = scmp.eq.s32.totalorder %s19, 1
      %p226 = scmp.ne.s32.totalorder %s221, %s223
      %p227 = scmp.eq.s32.totalorder %s19, 0
      %p228 = por %p226, %p227
      %p229 = scmp.ne.s32.totalorder %s221, %s223
      %p230 = scmp.eq.s32.totalorder %s24, 1
      %p231 = por %p229, %p230
      %p232 = scmp.ne.s32.totalorder %s223, %s224
      %p233 = scmp.eq.s32.totalorder %s24, 0
      %p234 = por %p232, %p233
      %p235 = scmp.ne.s32.totalorder %s223, %s224
      %p236 = scmp.eq.s32.totalorder %s25, 1
      %p237 = por %p235, %p236
      %p239 = scmp.ne.s32.totalorder %s224, %s238
      %p240 = scmp.eq.s32.totalorder %s25, 0
      %p241 = por %p239, %p240
      %s242 = ssub.s32 %s19, %s26
      %p243 = scmp.eq.s32.totalorder %s242, 0
      %s245 = sadd.s32 %s244, 1
      %s246 = scalar_select %p243, %s244, %s245
      %p249 = pneg %p243
      %p250 = scmp.eq.s32.totalorder %s19, 1
      %p251 = por %p249, %p250
      %p252 = scmp.ne.s32.totalorder %s244, %s247
      %p253 = scmp.eq.s32.totalorder %s19, 0
      %p254 = por %p252, %p253
      %p255 = scmp.ne.s32.totalorder %s244, %s247
      %p256 = scmp.eq.s32.totalorder %s24, 1
      %p257 = por %p255, %p256
      %p258 = scmp.ne.s32.totalorder %s247, %s248
      %p259 = scmp.eq.s32.totalorder %s24, 0
      %p260 = por %p258, %p259
      %p261 = scmp.ne.s32.totalorder %s247, %s248
      %p262 = scmp.eq.s32.totalorder %s25, 1
      %p263 = por %p261, %p262
      %p265 = scmp.ne.s32.totalorder %s248, %s264
      %p266 = scmp.eq.s32.totalorder %s25, 0
      %p267 = por %p265, %p266
      %p268 = scmp.le.s32.totalorder 1, %s19
      %p269 = scmp.lt.s32.totalorder %s19, 3
      %p270 = pnand %p268, %p269
      %p271 = pneg %p270
      // Predicated region
      $region9: #{tpu_custom_call.1} parent=5 // pred_check
        _
      $region10: #{tpu_custom_call.1} parent=5 // pred_check_branch
        %273 = sbr.rel (%p270) target = $region12
      $region11: #{tpu_custom_call.1} parent=5 // pred_region
        %s274 = ssub.s32 %s19, 1
        // Predicated region
        $region13: #{tpu_custom_call.1} parent=11 // pred_check
          %p275 = pneg %p66
        $region14: #{tpu_custom_call.1} parent=11 // pred_check_branch
          %277 = sbr.rel (%p275) target = $region16
        $region15: #{tpu_custom_call.1} parent=11 // pred_region
          _
        $region16: #{tpu_custom_call.1} parent=11 // pred_fallthru
          _
        // Predicated region
        $region17: #{tpu_custom_call.1} parent=11 // pred_check
          %p278 = pneg %p87
        $region18: #{tpu_custom_call.1} parent=11 // pred_check_branch
          %280 = sbr.rel (%p278) target = $region20
        $region19: #{tpu_custom_call.1} parent=11 // pred_region
          _
        $region20: #{tpu_custom_call.1} parent=11 // pred_fallthru
          _
        // Predicated region
        $region21: #{tpu_custom_call.1} parent=11 // pred_check
          %p281 = pneg %p108
        $region22: #{tpu_custom_call.1} parent=11 // pred_check_branch
          %283 = sbr.rel (%p281) target = $region24
        $region23: #{tpu_custom_call.1} parent=11 // pred_region
          _
        $region24: #{tpu_custom_call.1} parent=11 // pred_fallthru
          _
        // Predicated region
        $region25: #{tpu_custom_call.1} parent=11 // pred_check
          %p284 = pneg %p129
        $region26: #{tpu_custom_call.1} parent=11 // pred_check_branch
          %286 = sbr.rel (%p284) target = $region28
        $region27: #{tpu_custom_call.1} parent=11 // pred_region
          _
        $region28: #{tpu_custom_call.1} parent=11 // pred_fallthru
          _
        // Predicated region
        $region29: #{tpu_custom_call.1} parent=11 // pred_check
          %p287 = pneg %p150
        $region30: #{tpu_custom_call.1} parent=11 // pred_check_branch
          %289 = sbr.rel (%p287) target = $region32
        $region31: #{tpu_custom_call.1} parent=11 // pred_region
          _
        $region32: #{tpu_custom_call.1} parent=11 // pred_fallthru
          _
        // Predicated region
        $region33: #{tpu_custom_call.1} parent=11 // pred_check
          %p290 = pneg %p171
        $region34: #{tpu_custom_call.1} parent=11 // pred_check_branch
          %292 = sbr.rel (%p290) target = $region36
        $region35: #{tpu_custom_call.1} parent=11 // pred_region
          _
        $region36: #{tpu_custom_call.1} parent=11 // pred_fallthru
          _
        // Predicated region
        $region37: #{tpu_custom_call.1} parent=11 // pred_check
          %p293 = pneg %p192
        $region38: #{tpu_custom_call.1} parent=11 // pred_check_branch
          %295 = sbr.rel (%p293) target = $region40
        $region39: #{tpu_custom_call.1} parent=11 // pred_region
          _
        $region40: #{tpu_custom_call.1} parent=11 // pred_fallthru
          _
        // Predicated region
        $region41: #{tpu_custom_call.1} parent=11 // pred_check
          %p296 = pneg %p213
        $region42: #{tpu_custom_call.1} parent=11 // pred_check_branch
          %298 = sbr.rel (%p296) target = $region44
        $region43: #{tpu_custom_call.1} parent=11 // pred_region
          _
        $region44: #{tpu_custom_call.1} parent=11 // pred_fallthru
          _
        // Predicated region
        $region45: #{tpu_custom_call.1} parent=11 // pred_check
          %p299 = pneg %p234
        $region46: #{tpu_custom_call.1} parent=11 // pred_check_branch
          %301 = sbr.rel (%p299) target = $region48
        $region47: #{tpu_custom_call.1} parent=11 // pred_region
          _
        $region48: #{tpu_custom_call.1} parent=11 // pred_fallthru
          _
      $region12: #{tpu_custom_call.1} parent=5 // pred_fallthru
        _
      %p302 = scmp.lt.s32.totalorder %s19, 2
      // Predicated region
      $region49: #{tpu_custom_call.1} parent=5 // pred_check
        %p303 = pneg %p302
      $region50: #{tpu_custom_call.1} parent=5 // pred_check_branch
        %305 = sbr.rel (%p303) target = $region52
      $region51: #{tpu_custom_call.1} parent=5 // pred_region
        // Predicated region
        $region53: #{tpu_custom_call.1} parent=51 // pred_check
          %p306 = pneg %p39
        $region54: #{tpu_custom_call.1} parent=51 // pred_check_branch
          %308 = sbr.rel (%p306) target = $region56
        $region55: #{tpu_custom_call.1} parent=51 // pred_region
          %s309 = smul.u32 2, %s19
          %p310 = scmp.lt.s32.totalorder %s309, 3
          %s311 = scalar_select %p310, %s309, 3
          %s312 = smul.addr %s311, 2
          %s313 = smul.addr %s312, 4
          %s314 = scalar_lea.vmem %s0, %s313
          %s315 = smul.u32 2, %s19
        $region56: #{tpu_custom_call.1} parent=51 // pred_fallthru
          _
      $region52: #{tpu_custom_call.1} parent=5 // pred_fallthru
        _
      %p316 = scmp.le.s32.totalorder 1, %s19
      %p317 = scmp.lt.s32.totalorder %s19, 3
      %p318 = pnand %p316, %p317
      %p319 = pneg %p318
      // Predicated region
      $region57: #{tpu_custom_call.1} parent=5 // pred_check
        _
      $region58: #{tpu_custom_call.1} parent=5 // pred_check_branch
        %321 = sbr.rel (%p318) target = $region60
      $region59: #{tpu_custom_call.1} parent=5 // pred_region
        %s322 = ssub.s32 %s19, 1
        %s323 = smul.u32 2, %s24
        %p324 = scmp.lt.s32.totalorder %s323, 3
        %s325 = scalar_select %p324, %s323, 3
        %s326 = smul.addr %s325, 2
        %s327 = smul.addr %s326, 4
        %s328 = scalar_lea.vmem %s0, %s327
        %p329 = pneg %p45
        %p330 = pneg %p42
        %p331 = pneg %p66
        %p332 = pneg %p63
        %p333 = pneg %p87
        %p334 = pneg %p84
        %p335 = pneg %p108
        %p336 = pneg %p105
        %p337 = pneg %p129
        %p338 = pneg %p126
        %p339 = pneg %p150
        %p340 = pneg %p147
        %p341 = pneg %p171
        %p342 = pneg %p168
        %p343 = pneg %p192
        %p344 = pneg %p189
        %p345 = pneg %p213
        %p346 = pneg %p210
        %p347 = pneg %p234
        %p348 = pneg %p231
        %p349 = pneg %p260
        %p350 = pneg %p257
        %s351 = sand.u32 %s247, 1
        %s352 = scalar_lea.sflag [#allocation3], %s351
        %s353 = sand.u32 %s247, 1
        %s354 = smul.addr %s353, 16
        %s355 = scalar_lea.vmem [#allocation2], %s354
        %s356 = smul.u32 2, %s24
        %p357 = scmp.lt.s32.totalorder %s356, 3
        %s358 = scalar_select %p357, %s356, 3
        %s359 = smul.addr %s358, 2
        %s360 = smul.addr %s359, 4
        %s361 = scalar_lea.vmem %s0, %s360
        %s362 = smul.u32 2, %s24
        %s363 = smul.u32 2, %s24
        %v364 = vld [vmem:[%s361] sm:$0xff]
        %v365 = vld [vmem:[%s361 + $0x8] sm:$0xff]
        %v366 = vunpack.c.l.bf16 %v364
        %v367 = vunpack.c.h.bf16 %v364
        %v368 = vunpack.c.l.bf16 %v365
        %v369 = vunpack.c.h.bf16 %v365
        %v370 = vld [vmem:[%s3] sm:$0xf]
        %v371 = vld [vmem:[%s4] sm:$0xf]
        %373 = vset.pattern.permute.xlu0 0
        %374 = vperm.xlu0 %373, %v371
        %v375 = vpop.permute.xlu0 %374
        %vm377 = vcmask 130048
        %v379 = vsel %vm377, %v370, 0
        %381 = vmatprep.subr.mxu0 %v367
        %382 = vmatpush1.msra.mxu0 %v366
        %383 = vmatprep.subr.mxu0 %v369
        %384 = vmatpush1.msra.mxu0 %v368
        %385 = vmatprep.subr.mxu0 0.0
        %386 = vmatpush1.msra.mxu0 0.0
        %387 = vmatprep.subr.mxu0 0.0
        %388 = vmatpush1.msra.mxu0 0.0
        %389 = vmatprep.subr.mxu0 0.0
        %390 = vmatpush1.msra.mxu0 0.0
        %391 = vmatprep.subr.mxu0 0.0
        %392 = vmatpush1.msra.mxu0 0.0
        %393 = vmatprep.subr.mxu0 0.0
        %394 = vmatpush1.msra.mxu0 0.0
        %395 = vmatprep.subr.mxu0 0.0
        %396 = vmatpush1.msra.mxu0 0.0
        %397 = vmatprep.subr.mxu0 0.0
        %398 = vmatpush1.msra.mxu0 0.0
        %399 = vmatprep.subr.mxu0 0.0
        %400 = vmatpush1.msra.mxu0 0.0
        %401 = vmatprep.subr.mxu0 0.0
        %402 = vmatpush1.msra.mxu0 0.0
        %403 = vmatprep.subr.mxu0 0.0
        %404 = vmatpush1.msra.mxu0 0.0
        %405 = vmatprep.subr.mxu0 0.0
        %406 = vmatpush1.msra.mxu0 0.0
        %407 = vmatprep.subr.mxu0 0.0
        %408 = vmatpush1.msra.mxu0 0.0
        %409 = vmatprep.subr.mxu0 0.0
        %410 = vmatpush1.msra.mxu0 0.0
        %411 = vmatprep.subr.mxu0 0.0
        %412 = vmatpush1.msra.mxu0 0.0
        %413 = vmatprep.subr.mxu0 0.0
        %414 = vmatpush1.msra.mxu0 0.0
        %415 = vmatprep.subr.mxu0 0.0
        %416 = vmatpush1.msra.mxu0 0.0
        %417 = vmatprep.subr.mxu0 0.0
        %418 = vmatpush1.msra.mxu0 0.0
        %419 = vmatprep.subr.mxu0 0.0
        %420 = vmatpush1.msra.mxu0 0.0
        %421 = vmatprep.subr.mxu0 0.0
        %422 = vmatpush1.msra.mxu0 0.0
        %423 = vmatprep.subr.mxu0 0.0
        %424 = vmatpush1.msra.mxu0 0.0
        %425 = vmatprep.subr.mxu0 0.0
        %426 = vmatpush1.msra.mxu0 0.0
        %427 = vmatprep.subr.mxu0 0.0
        %428 = vmatpush1.msra.mxu0 0.0
        %429 = vmatprep.subr.mxu0 0.0
        %430 = vmatpush1.msra.mxu0 0.0
        %431 = vmatprep.subr.mxu0 0.0
        %432 = vmatpush1.msra.mxu0 0.0
        %433 = vmatprep.subr.mxu0 0.0
        %434 = vmatpush1.msra.mxu0 0.0
        %435 = vmatprep.subr.mxu0 0.0
        %436 = vmatpush1.msra.mxu0 0.0
        %437 = vmatprep.subr.mxu0 0.0
        %438 = vmatpush1.msra.mxu0 0.0
        %439 = vmatprep.subr.mxu0 0.0
        %440 = vmatpush1.msra.mxu0 0.0
        %441 = vmatprep.subr.mxu0 0.0
        %442 = vmatpush1.msra.mxu0 0.0
        %443 = vmatprep.subr.mxu0 0.0
        %444 = vmatpush1.msra.mxu0 0.0
        %445 = vmatprep.mubr.f32.mxu0 0.0
        %446 = vmatmul.mubr.f32.gmra.mrb[0].mxu0 %v379
        %v447 = vpop.f32.mrb[0].mxu0
        %v448 = vadd.f32 %v375, %v447
        %v449 = vpop.f32.mrb[0].mxu0
        %v450 = vadd.f32 %v375, %v449
        %451 = vdwg.mxu0
        %v452 = vld [vmem:[%s1] sm:$0xff]
        %v453 = vld [vmem:[%s1 + $0x8] sm:$0xff]
        %v454 = vld [vmem:[%s1 + $0x10] sm:$0xff]
        %v455 = vld [vmem:[%s1 + $0x18] sm:$0xff]
        %v456 = vld [vmem:[%s1 + $0x20] sm:$0xff]
        %v457 = vld [vmem:[%s1 + $0x28] sm:$0xff]
        %v458 = vld [vmem:[%s1 + $0x30] sm:$0xff]
        %v459 = vld [vmem:[%s1 + $0x38] sm:$0xff]
        %v460 = vld [vmem:[%s1 + $0x40] sm:$0xff]
        %v461 = vld [vmem:[%s1 + $0x48] sm:$0xff]
        %v462 = vld [vmem:[%s1 + $0x50] sm:$0xff]
        %v463 = vld [vmem:[%s1 + $0x58] sm:$0xff]
        %v464 = vld [vmem:[%s1 + $0x60] sm:$0xff]
        %v465 = vld [vmem:[%s1 + $0x68] sm:$0xff]
        %v466 = vld [vmem:[%s1 + $0x70] sm:$0xff]
        %v467 = vld [vmem:[%s1 + $0x78] sm:$0xff]
        %v468 = vld [vmem:[%s1 + $0x80] sm:$0xff]
        %v469 = vld [vmem:[%s1 + $0x88] sm:$0xff]
        %v470 = vld [vmem:[%s1 + $0x90] sm:$0xff]
        %v471 = vld [vmem:[%s1 + $0x98] sm:$0xff]
        %v472 = vld [vmem:[%s1 + $0xa0] sm:$0xff]
        %v473 = vld [vmem:[%s1 + $0xa8] sm:$0xff]
        %v474 = vld [vmem:[%s1 + $0xb0] sm:$0xff]
        %v475 = vld [vmem:[%s1 + $0xb8] sm:$0xff]
        %v476 = vld [vmem:[%s1 + $0xc0] sm:$0xff]
        %v477 = vld [vmem:[%s1 + $0xc8] sm:$0xff]
        %v478 = vld [vmem:[%s1 + $0xd0] sm:$0xff]
        %v479 = vld [vmem:[%s1 + $0xd8] sm:$0xff]
        %v480 = vld [vmem:[%s1 + $0xe0] sm:$0xff]
        %v481 = vld [vmem:[%s1 + $0xe8] sm:$0xff]
        %v482 = vld [vmem:[%s1 + $0xf0] sm:$0xff]
        %v483 = vld [vmem:[%s1 + $0xf8] sm:$0xff]
        %484 = vmatprep.subr.mxu0 0.0
        %485 = vmatpush1.msra.mxu0 %v452
        %486 = vmatprep.subr.mxu0 0.0
        %487 = vmatpush1.msra.mxu0 %v453
        %488 = vmatprep.subr.mxu0 0.0
        %489 = vmatpush1.msra.mxu0 %v454
        %490 = vmatprep.subr.mxu0 0.0
        %491 = vmatpush1.msra.mxu0 %v455
        %492 = vmatprep.subr.mxu0 0.0
        %493 = vmatpush1.msra.mxu0 %v456
        %494 = vmatprep.subr.mxu0 0.0
        %495 = vmatpush1.msra.mxu0 %v457
        %496 = vmatprep.subr.mxu0 0.0
        %497 = vmatpush1.msra.mxu0 %v458
        %498 = vmatprep.subr.mxu0 0.0
        %499 = vmatpush1.msra.mxu0 %v459
        %500 = vmatprep.subr.mxu0 0.0
        %501 = vmatpush1.msra.mxu0 %v460
        %502 = vmatprep.subr.mxu0 0.0
        %503 = vmatpush1.msra.mxu0 %v461
        %504 = vmatprep.subr.mxu0 0.0
        %505 = vmatpush1.msra.mxu0 %v462
        %506 = vmatprep.subr.mxu0 0.0
        %507 = vmatpush1.msra.mxu0 %v463
        %508 = vmatprep.subr.mxu0 0.0
        %509 = vmatpush1.msra.mxu0 %v464
        %510 = vmatprep.subr.mxu0 0.0
        %511 = vmatpush1.msra.mxu0 %v465
        %512 = vmatprep.subr.mxu0 0.0
        %513 = vmatpush1.msra.mxu0 %v466
        %514 = vmatprep.subr.mxu0 0.0
        %515 = vmatpush1.msra.mxu0 %v467
        %516 = vmatprep.subr.mxu0 0.0
        %517 = vmatpush1.msra.mxu0 %v468
        %518 = vmatprep.subr.mxu0 0.0
        %519 = vmatpush1.msra.mxu0 %v469
        %520 = vmatprep.subr.mxu0 0.0
        %521 = vmatpush1.msra.mxu0 %v470
        %522 = vmatprep.subr.mxu0 0.0
        %523 = vmatpush1.msra.mxu0 %v471
        %524 = vmatprep.subr.mxu0 0.0
        %525 = vmatpush1.msra.mxu0 %v472
        %526 = vmatprep.subr.mxu0 0.0
        %527 = vmatpush1.msra.mxu0 %v473
        %528 = vmatprep.subr.mxu0 0.0
        %529 = vmatpush1.msra.mxu0 %v474
        %530 = vmatprep.subr.mxu0 0.0
        %531 = vmatpush1.msra.mxu0 %v475
        %532 = vmatprep.subr.mxu0 0.0
        %533 = vmatpush1.msra.mxu0 %v476
        %534 = vmatprep.subr.mxu0 0.0
        %535 = vmatpush1.msra.mxu0 %v477
        %536 = vmatprep.subr.mxu0 0.0
        %537 = vmatpush1.msra.mxu0 %v478
        %538 = vmatprep.subr.mxu0 0.0
        %539 = vmatpush1.msra.mxu0 %v479
        %540 = vmatprep.subr.mxu0 0.0
        %541 = vmatpush1.msra.mxu0 %v480
        %542 = vmatprep.subr.mxu0 0.0
        %543 = vmatpush1.msra.mxu0 %v481
        %544 = vmatprep.subr.mxu0 0.0
        %545 = vmatpush1.msra.mxu0 %v482
        %546 = vmatprep.subr.mxu0 0.0
        %547 = vmatpush1.msra.mxu0 %v483
        %548 = vmatprep.mubr.f32.mxu0 %v367
        %549 = vmatmul.mubr.f32.gmra.mrb[0].mxu0 %v366
        %v550 = vpop.f32.mrb[0].mxu0
        %v551 = vadd.f32 0.0, %v550
        %v552 = vpop.f32.mrb[0].mxu0
        %553 = vmatprep.mubr.f32.mxu0 %v369
        %554 = vmatmul.mubr.f32.gmra.mrb[0].mxu0 %v368
        %v555 = vpop.f32.mrb[0].mxu0
        %v556 = vadd.f32 0.0, %v555
        %v557 = vpop.f32.mrb[0].mxu0
        %558 = vdwg.mxu0
        %v559 = vld [vmem:[%s5] sm:$0xf]
        %v560 = vld [vmem:[%s6] sm:$0xf]
        %562 = vset.pattern.permute.xlu0 0
        %563 = vperm.xlu0 %562, %v560
        %v564 = vpop.permute.xlu0 %563
        %v567 = vsel %vm377, %v559, 0
        %569 = vmatprep.subr.mxu0 0.0
        %570 = vmatpush1.msra.mxu0 %v551
        %571 = vmatprep.subr.mxu0 0.0
        %572 = vmatpush1.msra.mxu0 %v556
        %573 = vmatprep.subr.mxu0 0.0
        %574 = vmatpush1.msra.mxu0 0.0
        %575 = vmatprep.subr.mxu0 0.0
        %576 = vmatpush1.msra.mxu0 0.0
        %577 = vmatprep.subr.mxu0 0.0
        %578 = vmatpush1.msra.mxu0 0.0
        %579 = vmatprep.subr.mxu0 0.0
        %580 = vmatpush1.msra.mxu0 0.0
        %581 = vmatprep.subr.mxu0 0.0
        %582 = vmatpush1.msra.mxu0 0.0
        %583 = vmatprep.subr.mxu0 0.0
        %584 = vmatpush1.msra.mxu0 0.0
        %585 = vmatprep.subr.mxu0 0.0
        %586 = vmatpush1.msra.mxu0 0.0
        %587 = vmatprep.subr.mxu0 0.0
        %588 = vmatpush1.msra.mxu0 0.0
        %589 = vmatprep.subr.mxu0 0.0
        %590 = vmatpush1.msra.mxu0 0.0
        %591 = vmatprep.subr.mxu0 0.0
        %592 = vmatpush1.msra.mxu0 0.0
        %593 = vmatprep.subr.mxu0 0.0
        %594 = vmatpush1.msra.mxu0 0.0
        %595 = vmatprep.subr.mxu0 0.0
        %596 = vmatpush1.msra.mxu0 0.0
        %597 = vmatprep.subr.mxu0 0.0
        %598 = vmatpush1.msra.mxu0 0.0
        %599 = vmatprep.subr.mxu0 0.0
        %600 = vmatpush1.msra.mxu0 0.0
        %601 = vmatprep.subr.mxu0 0.0
        %602 = vmatpush1.msra.mxu0 0.0
        %603 = vmatprep.subr.mxu0 0.0
        %604 = vmatpush1.msra.mxu0 0.0
        %605 = vmatprep.subr.mxu0 0.0
        %606 = vmatpush1.msra.mxu0 0.0
        %607 = vmatprep.subr.mxu0 0.0
        %608 = vmatpush1.msra.mxu0 0.0
        %609 = vmatprep.subr.mxu0 0.0
        %610 = vmatpush1.msra.mxu0 0.0
        %611 = vmatprep.subr.mxu0 0.0
        %612 = vmatpush1.msra.mxu0 0.0
        %613 = vmatprep.subr.mxu0 0.0
        %614 = vmatpush1.msra.mxu0 0.0
        %615 = vmatprep.subr.mxu0 0.0
        %616 = vmatpush1.msra.mxu0 0.0
        %617 = vmatprep.subr.mxu0 0.0
        %618 = vmatpush1.msra.mxu0 0.0
        %619 = vmatprep.subr.mxu0 0.0
        %620 = vmatpush1.msra.mxu0 0.0
        %621 = vmatprep.subr.mxu0 0.0
        %622 = vmatpush1.msra.mxu0 0.0
        %623 = vmatprep.subr.mxu0 0.0
        %624 = vmatpush1.msra.mxu0 0.0
        %625 = vmatprep.subr.mxu0 0.0
        %626 = vmatpush1.msra.mxu0 0.0
        %627 = vmatprep.subr.mxu0 0.0
        %628 = vmatpush1.msra.mxu0 0.0
        %629 = vmatprep.subr.mxu0 0.0
        %630 = vmatpush1.msra.mxu0 0.0
        %631 = vmatprep.subr.mxu0 0.0
        %632 = vmatpush1.msra.mxu0 0.0
        %633 = vmatprep.mubr.f32.mxu0 0.0
        %634 = vmatmul.mubr.f32.gmra.mrb[0].mxu0 %v567
        %v635 = vpop.f32.mrb[0].mxu0
        %v636 = vadd.f32 %v564, %v635
        %v637 = vpop.f32.mrb[0].mxu0
        %638 = vdwg.mxu0
        %v639 = vld [vmem:[%s2] sm:$0xff]
        %v640 = vld [vmem:[%s2 + $0x8] sm:$0xff]
        %v641 = vld [vmem:[%s2 + $0x10] sm:$0x1]
        %v642 = vld [vmem:[%s2 + $0x18] sm:$0x1]
        %v643 = vld [vmem:[%s7] sm:$0xf]
        %645 = vset.pattern.permute.xlu0 0
        %646 = vperm.xlu0 %645, %v643
        %v647 = vpop.permute.xlu0 %646
        %649 = vrot.lane.b32.xlu0 %v448, 17
        %v650 = vpop.permute.xlu0 %649
        %651 = vrot.lane.b32.xlu0 %v450, 17
        %v652 = vpop.permute.xlu0 %651
        %v653 = vlaneseq
        %v654 = vand.u32 %v653, 127
        %vm655 = vcmp.lt.s32.totalorder %v654, 17
        %v656 = vsel %vm655, %v650, %v652
        %v657 = vsel %vm655, %v652, %v650
        %v658 = vlaneseq
        %v659 = vshrl.u32 %v658, 7
        %v660 = vsub.s32 0, %v659
        %v661 = vrot.slane %v639, %v660
        %v662 = vlaneseq
        %v663 = vshrl.u32 %v662, 7
        %v664 = vsub.s32 0, %v663
        %v665 = vrot.slane %v640, %v664
        %667 = vset.pattern.permute.xlu0 0
        %668 = vperm.xlu0 %667, %v636
        %v669 = vpop.permute.xlu0 %668
        %v671 = vmul.f32 %v661, %v669
        %v672 = vmul.f32 %v665, %v669
        %v673 = vmul.f32 %v657, %v671
        %v674 = vmul.f32 %v656, %v672
        %v675 = vadd.f32 %v647, %v673
        %v676 = vadd.f32 %v647, %v674
        %677 = vrot.lane.b32.xlu0 %v448, 16
        %v678 = vpop.permute.xlu0 %677
        %679 = vrot.lane.b32.xlu0 %v450, 16
        %v680 = vpop.permute.xlu0 %679
        %vm681 = vcmp.lt.s32.totalorder %v654, 16
        %v682 = vsel %vm681, %v678, %v680
        %v683 = vsel %vm681, %v680, %v678
        %v684 = vlaneseq
        %v685 = vshrl.u32 %v684, 7
        %v686 = vsub.s32 1, %v685
        %v687 = vrot.slane %v639, %v686
        %v688 = vlaneseq
        %v689 = vshrl.u32 %v688, 7
        %v690 = vsub.s32 1, %v689
        %v691 = vrot.slane %v640, %v690
        %692 = vset.pattern.permute.xlu0 1
        %693 = vperm.xlu0 %692, %v636
        %v694 = vpop.permute.xlu0 %693
        %v696 = vmul.f32 %v687, %v694
        %v697 = vmul.f32 %v691, %v694
        %v698 = vmul.f32 %v683, %v696
        %v699 = vmul.f32 %v682, %v697
        %v700 = vadd.f32 %v675, %v698
        %v701 = vadd.f32 %v676, %v699
        %702 = vrot.lane.b32.xlu0 %v448, 15
        %v703 = vpop.permute.xlu0 %702
        %704 = vrot.lane.b32.xlu0 %v450, 15
        %v705 = vpop.permute.xlu0 %704
        %vm706 = vcmp.lt.s32.totalorder %v654, 15
        %v707 = vsel %vm706, %v703, %v705
        %v708 = vsel %vm706, %v705, %v703
        %v709 = vlaneseq
        %v710 = vshrl.u32 %v709, 7
        %v711 = vsub.s32 2, %v710
        %v712 = vrot.slane %v639, %v711
        %v713 = vlaneseq
        %v714 = vshrl.u32 %v713, 7
        %v715 = vsub.s32 2, %v714
        %v716 = vrot.slane %v640, %v715
        %717 = vset.pattern.permute.xlu0 2
        %718 = vperm.xlu0 %717, %v636
        %v719 = vpop.permute.xlu0 %718
        %v721 = vmul.f32 %v712, %v719
        %v722 = vmul.f32 %v716, %v719
        %v723 = vmul.f32 %v708, %v721
        %v724 = vmul.f32 %v707, %v722
        %v725 = vadd.f32 %v700, %v723
        %v726 = vadd.f32 %v701, %v724
        %727 = vrot.lane.b32.xlu0 %v448, 1
        %v728 = vpop.permute.xlu0 %727
        %729 = vrot.lane.b32.xlu0 %v450, 1
        %v730 = vpop.permute.xlu0 %729
        %vm731 = vcmp.lt.s32.totalorder %v654, 1
        %v732 = vsel %vm731, %v728, %v730
        %v733 = vsel %vm731, %v730, %v728
        %v734 = vlaneseq
        %v735 = vshrl.u32 %v734, 7
        %v736 = vsub.s32 3, %v735
        %v737 = vrot.slane %v639, %v736
        %v738 = vlaneseq
        %v739 = vshrl.u32 %v738, 7
        %v740 = vsub.s32 3, %v739
        %v741 = vrot.slane %v640, %v740
        %742 = vset.pattern.permute.xlu0 3
        %743 = vperm.xlu0 %742, %v636
        %v744 = vpop.permute.xlu0 %743
        %v746 = vmul.f32 %v737, %v744
        %v747 = vmul.f32 %v741, %v744
        %v748 = vmul.f32 %v733, %v746
        %v749 = vmul.f32 %v732, %v747
        %v750 = vadd.f32 %v725, %v748
        %v751 = vadd.f32 %v726, %v749
        %752 = vset.pattern.permute.xlu0 4
        %753 = vperm.xlu0 %752, %v636
        %v754 = vpop.permute.xlu0 %753
        %v756 = vmul.f32 %v448, %v754
        %v757 = vmul.f32 %v450, %v754
        %v758 = vadd.f32 %v750, %v756
        %v759 = vadd.f32 %v751, %v757
        %760 = vrot.lane.b32.xlu0 %v448, 127
        %v761 = vpop.permute.xlu0 %760
        %762 = vrot.lane.b32.xlu0 %v450, 127
        %v763 = vpop.permute.xlu0 %762
        %vm764 = vcmp.lt.s32.totalorder %v654, 127
        %v765 = vsel %vm764, %v761, %v763
        %v766 = vsel %vm764, %v763, %v761
        %v767 = vlaneseq
        %v768 = vshrl.u32 %v767, 7
        %v769 = vsub.s32 5, %v768
        %v770 = vrot.slane %v639, %v769
        %v771 = vlaneseq
        %v772 = vshrl.u32 %v771, 7
        %v773 = vsub.s32 5, %v772
        %v774 = vrot.slane %v640, %v773
        %775 = vset.pattern.permute.xlu0 5
        %776 = vperm.xlu0 %775, %v636
        %v777 = vpop.permute.xlu0 %776
        %v779 = vmul.f32 %v770, %v777
        %v780 = vmul.f32 %v774, %v777
        %v781 = vmul.f32 %v765, %v779
        %v782 = vmul.f32 %v766, %v780
        %v783 = vadd.f32 %v758, %v781
        %v784 = vadd.f32 %v759, %v782
        %785 = vrot.lane.b32.xlu0 %v448, 113
        %v786 = vpop.permute.xlu0 %785
        %787 = vrot.lane.b32.xlu0 %v450, 113
        %v788 = vpop.permute.xlu0 %787
        %vm789 = vcmp.lt.s32.totalorder %v654, 113
        %v790 = vsel %vm789, %v786, %v788
        %v791 = vsel %vm789, %v788, %v786
        %v792 = vlaneseq
        %v793 = vshrl.u32 %v792, 7
        %v794 = vsub.s32 6, %v793
        %v795 = vrot.slane %v639, %v794
        %v796 = vlaneseq
        %v797 = vshrl.u32 %v796, 7
        %v798 = vsub.s32 6, %v797
        %v799 = vrot.slane %v640, %v798
        %800 = vset.pattern.permute.xlu0 6
        %801 = vperm.xlu0 %800, %v636
        %v802 = vpop.permute.xlu0 %801
        %v804 = vmul.f32 %v795, %v802
        %v805 = vmul.f32 %v799, %v802
        %v806 = vmul.f32 %v790, %v804
        %v807 = vmul.f32 %v791, %v805
        %v808 = vadd.f32 %v783, %v806
        %v809 = vadd.f32 %v784, %v807
        %810 = vrot.lane.b32.xlu0 %v448, 112
        %v811 = vpop.permute.xlu0 %810
        %812 = vrot.lane.b32.xlu0 %v450, 112
        %v813 = vpop.permute.xlu0 %812
        %vm814 = vcmp.lt.s32.totalorder %v654, 112
        %v815 = vsel %vm814, %v811, %v813
        %v816 = vsel %vm814, %v813, %v811
        %v817 = vlaneseq
        %v818 = vshrl.u32 %v817, 7
        %v819 = vsub.s32 7, %v818
        %v820 = vrot.slane %v639, %v819
        %v821 = vlaneseq
        %v822 = vshrl.u32 %v821, 7
        %v823 = vsub.s32 7, %v822
        %v824 = vrot.slane %v640, %v823
        %825 = vset.pattern.permute.xlu0 7
        %826 = vperm.xlu0 %825, %v636
        %v827 = vpop.permute.xlu0 %826
        %v829 = vmul.f32 %v820, %v827
        %v830 = vmul.f32 %v824, %v827
        %v831 = vmul.f32 %v815, %v829
        %v832 = vmul.f32 %v816, %v830
        %v833 = vadd.f32 %v808, %v831
        %v834 = vadd.f32 %v809, %v832
        %835 = vrot.lane.b32.xlu0 %v448, 111
        %v836 = vpop.permute.xlu0 %835
        %837 = vrot.lane.b32.xlu0 %v450, 111
        %v838 = vpop.permute.xlu0 %837
        %vm839 = vcmp.lt.s32.totalorder %v654, 111
        %v840 = vsel %vm839, %v836, %v838
        %v841 = vsel %vm839, %v838, %v836
        %v842 = vlaneseq
        %v843 = vshrl.u32 %v842, 7
        %v844 = vsub.s32 0, %v843
        %v845 = vrot.slane %v641, %v844
        %v846 = vlaneseq
        %v847 = vshrl.u32 %v846, 7
        %v848 = vsub.s32 0, %v847
        %v849 = vrot.slane %v642, %v848
        %850 = vset.pattern.permute.xlu0 8
        %851 = vperm.xlu0 %850, %v636
        %v852 = vpop.permute.xlu0 %851
        %v854 = vmul.f32 %v845, %v852
        %v855 = vmul.f32 %v849, %v852
        %v856 = vmul.f32 %v840, %v854
        %v857 = vmul.f32 %v841, %v855
        %v858 = vadd.f32 %v833, %v856
        %v859 = vadd.f32 %v834, %v857
        %v860 = vld [vmem:[%s8] sm:$0xff]
        %v861 = vld [vmem:[%s8 + $0x8] sm:$0xff]
        %v862 = vld [vmem:[%s9] sm:$0xff]
        %v863 = vld [vmem:[%s9 + $0x8] sm:$0xff]
        %865 = vset.pattern.permute.xlu0 0
        %866 = vperm.xlu0 %865, %v862
        %v867 = vpop.permute.xlu0 %866
        %870 = vset.pattern.permute.xlu0 0
        %871 = vperm.xlu0 %870, %v863
        %v872 = vpop.permute.xlu0 %871
        %vm874 = vcmask 31744
        %v876 = vsel %vm874, %v860, 0
        %v879 = vsel %vm874, %v861, 0
        %vm881 = vcmask 1043456
        %v883 = vsel %vm881, %v858, 0
        %v886 = vsel %vm881, %v859, 0
        %888 = vmatprep.subr.mxu0 %v886
        %889 = vmatpush1.msra.mxu0 %v883
        %890 = vmatprep.subr.mxu0 0.0
        %891 = vmatpush1.msra.mxu0 0.0
        %892 = vmatprep.subr.mxu0 0.0
        %893 = vmatpush1.msra.mxu0 0.0
        %894 = vmatprep.subr.mxu0 0.0
        %895 = vmatpush1.msra.mxu0 0.0
        %896 = vmatprep.subr.mxu0 0.0
        %897 = vmatpush1.msra.mxu0 0.0
        %898 = vmatprep.subr.mxu0 0.0
        %899 = vmatpush1.msra.mxu0 0.0
        %900 = vmatprep.subr.mxu0 0.0
        %901 = vmatpush1.msra.mxu0 0.0
        %902 = vmatprep.subr.mxu0 0.0
        %903 = vmatpush1.msra.mxu0 0.0
        %904 = vmatprep.subr.mxu0 0.0
        %905 = vmatpush1.msra.mxu0 0.0
        %906 = vmatprep.subr.mxu0 0.0
        %907 = vmatpush1.msra.mxu0 0.0
        %908 = vmatprep.subr.mxu0 0.0
        %909 = vmatpush1.msra.mxu0 0.0
        %910 = vmatprep.subr.mxu0 0.0
        %911 = vmatpush1.msra.mxu0 0.0
        %912 = vmatprep.subr.mxu0 0.0
        %913 = vmatpush1.msra.mxu0 0.0
        %914 = vmatprep.subr.mxu0 0.0
        %915 = vmatpush1.msra.mxu0 0.0
        %916 = vmatprep.subr.mxu0 0.0
        %917 = vmatpush1.msra.mxu0 0.0
        %918 = vmatprep.subr.mxu0 0.0
        %919 = vmatpush1.msra.mxu0 0.0
        %920 = vmatprep.subr.mxu0 0.0
        %921 = vmatpush1.msra.mxu0 0.0
        %922 = vmatprep.subr.mxu0 0.0
        %923 = vmatpush1.msra.mxu0 0.0
        %924 = vmatprep.subr.mxu0 0.0
        %925 = vmatpush1.msra.mxu0 0.0
        %926 = vmatprep.subr.mxu0 0.0
        %927 = vmatpush1.msra.mxu0 0.0
        %928 = vmatprep.subr.mxu0 0.0
        %929 = vmatpush1.msra.mxu0 0.0
        %930 = vmatprep.subr.mxu0 0.0
        %931 = vmatpush1.msra.mxu0 0.0
        %932 = vmatprep.subr.mxu0 0.0
        %933 = vmatpush1.msra.mxu0 0.0
        %934 = vmatprep.subr.mxu0 0.0
        %935 = vmatpush1.msra.mxu0 0.0
        %936 = vmatprep.subr.mxu0 0.0
        %937 = vmatpush1.msra.mxu0 0.0
        %938 = vmatprep.subr.mxu0 0.0
        %939 = vmatpush1.msra.mxu0 0.0
        %940 = vmatprep.subr.mxu0 0.0
        %941 = vmatpush1.msra.mxu0 0.0
        %942 = vmatprep.subr.mxu0 0.0
        %943 = vmatpush1.msra.mxu0 0.0
        %944 = vmatprep.subr.mxu0 0.0
        %945 = vmatpush1.msra.mxu0 0.0
        %946 = vmatprep.subr.mxu0 0.0
        %947 = vmatpush1.msra.mxu0 0.0
        %948 = vmatprep.subr.mxu0 0.0
        %949 = vmatpush1.msra.mxu0 0.0
        %950 = vmatprep.subr.mxu0 0.0
        %951 = vmatpush1.msra.mxu0 0.0
        %952 = vmatprep.mubr.f32.mxu0 0.0
        %953 = vmatmul.mubr.f32.gmra.mrb[0].mxu0 %v876
        %v954 = vpop.f32.mrb[0].mxu0
        %v955 = vadd.f32 %v867, %v954
        %v956 = vpop.f32.mrb[0].mxu0
        %v957 = vadd.f32 %v867, %v956
        %958 = vmatprep.mubr.f32.mxu0 0.0
        %959 = vmatmul.mubr.f32.gmra.mrb[0].mxu0 %v879
        %v960 = vpop.f32.mrb[0].mxu0
        %v961 = vadd.f32 %v872, %v960
        %v962 = vpop.f32.mrb[0].mxu0
        %v963 = vadd.f32 %v872, %v962
        %964 = vdwg.mxu0
        %v965 = vpack.c.bf16 %v961, %v955
        %v966 = vpack.c.bf16 %v963, %v957
        %v969 = vunpack.c.l.b16 %v965
        %v970 = vunpack.c.l.b16 %v966
        %v971 = vunpack.c.h.b16 %v965
        %v972 = vunpack.c.h.b16 %v966
        %v973 = vpack.c.b16 %v970, %v969
        %v974 = vpack.c.b16 %v972, %v971
        %977 = vst [vmem:[%s355] sm:$0xff] %v973
        %978 = vst [vmem:[%s355 + $0x8] sm:$0xff] %v974
        %s979 = sand.u32 %s247, 1
        %s980 = scalar_lea.sflag [#allocation3], %s979
        %s981 = sand.u32 %s247, 1
        %s982 = smul.addr %s981, 16
        %s983 = scalar_lea.vmem [#allocation2], %s982
        // Predicated region
        $region61: #{tpu_custom_call.1} parent=59 // pred_check
          %p984 = pneg %p257
        $region62: #{tpu_custom_call.1} parent=59 // pred_check_branch
          %986 = sbr.rel (%p984) target = $region64
        $region63: #{tpu_custom_call.1} parent=59 // pred_region
          %s987 = smul.u32 2, %s24
          %s989 = ssub.s32 256, 256
          %990 = vsyncadd %s980, %s989
          %s991 = smul.addr %s987, 2
          %s992 = smul.addr %s991, 64
          %s993 = scalar_lea.hbm %s10, %s992
          %s994 = sshll.u32 %s983, 4
          %s995 = int_to_ptr.vmem [resolvable:$true] %s994
          %1000 = dma.vmem_to_hbm [thread:$0]  %s995, 256, %s993, %s980, 128, 128, 8
        $region64: #{tpu_custom_call.1} parent=59 // pred_fallthru
          _
      $region60: #{tpu_custom_call.1} parent=5 // pred_fallthru
        _
      %p1001 = scmp.le.s32.totalorder 2, %s19
      // Predicated region
      $region65: #{tpu_custom_call.1} parent=5 // pred_check
        %p1002 = pneg %p1001
      $region66: #{tpu_custom_call.1} parent=5 // pred_check_branch
        %1004 = sbr.rel (%p1002) target = $region68
      $region67: #{tpu_custom_call.1} parent=5 // pred_region
        %s1005 = ssub.s32 %s19, 2
        // Predicated region
        $region69: #{tpu_custom_call.1} parent=67 // pred_check
          %p1006 = pneg %p263
        $region70: #{tpu_custom_call.1} parent=67 // pred_check_branch
          %1008 = sbr.rel (%p1006) target = $region72
        $region71: #{tpu_custom_call.1} parent=67 // pred_region
          %s1009 = sand.u32 %s248, 1
          %s1010 = scalar_lea.sflag [#allocation3], %s1009
          %s1011 = sand.u32 %s248, 1
          %s1012 = smul.addr %s1011, 16
          %s1013 = scalar_lea.vmem [#allocation2], %s1012
          %1014 = dma.done %s1010, 256
        $region72: #{tpu_custom_call.1} parent=67 // pred_fallthru
          _
      $region68: #{tpu_custom_call.1} parent=5 // pred_fallthru
        _
    $region6: #{tpu_custom_call.1} parent=1 // loop_footer
      %s23 = sadd.s32 1, %s19
    $region7: #{tpu_custom_call.1} parent=1 // loop_footer_branch
      %18 = sbr.rel target = $region3
    $region8: #{tpu_custom_call.1} parent=1 // loop_exit
      _
    %1015 = vsyncpa [#allocation3], 1
    %s1016 = scalar_lea.sflag [#allocation3], 1
    %1017 = vsyncpa %s1016, 1

</llo_original>
